<compile_context>
chip_gen: v6e
topology: v6e:2x2x1
jax: 0.10.0
libtpu: 0.0.40
codegen_flags: <defaults>
</compile_context>

<pallas_src>
import functools

import jax
import jax.numpy as jnp
from jax.experimental import pallas as pl
from jax.experimental.pallas import tpu as pltpu

HIDDEN = 128


def _round_up(x, m):
    return (x + m - 1) // m * m


def _cdiv(a, b):
    return (a + b - 1) // b


def _default_bf16_epilogue():
    # v5e and older have no bf16 VALU -> keep the elementwise epilogue in f32 there.
    try:
        kind = jax.devices()[0].device_kind.lower()
    except Exception:
        return True
    return not any(v in kind for v in ("v2", "v3", "v4", "v5"))


def _mlp_q(x_ref, w1_ref, b1_ref, w2_ref, b2_ref, w3_ref, b3_ref, *, bf16_epilogue):
    """Shared 3-layer MLP body (bf16 MXU operands, f32 accumulate). Returns f32 Q."""
    bf = jnp.bfloat16
    # layer1 + ReLU
    h1 = jnp.dot(x_ref[...], w1_ref[...], preferred_element_type=jnp.float32)
    if bf16_epilogue:
        h1 = jnp.maximum(h1.astype(bf) + b1_ref[...].astype(bf), 0.0)
    else:
        h1 = jnp.maximum(h1 + b1_ref[...], 0.0).astype(bf)
    # layer2 + ReLU
    h2 = jnp.dot(h1, w2_ref[...], preferred_element_type=jnp.float32)
    if bf16_epilogue:
        h2 = jnp.maximum(h2.astype(bf) + b2_ref[...].astype(bf), 0.0)
    else:
        h2 = jnp.maximum(h2 + b2_ref[...], 0.0).astype(bf)
    # layer3 (no activation)
    q = jnp.dot(h2, w3_ref[...], preferred_element_type=jnp.float32)
    return q + b3_ref[...]


def _dqn_fwd_kernel(x_ref, w1_ref, b1_ref, w2_ref, b2_ref, w3_ref, b3_ref,
                    out_ref, *, bf16_epilogue):
    q = _mlp_q(x_ref, w1_ref, b1_ref, w2_ref, b2_ref, w3_ref, b3_ref,
               bf16_epilogue=bf16_epilogue)
    out_ref[...] = q.astype(out_ref.dtype)   # lane-dense (128-wide) store


def _dqn_argmax_kernel(x_ref, w1_ref, b1_ref, w2_ref, b2_ref, w3_ref, b3_ref,
                       act_ref, *, n_actions, bf16_epilogue):
    """Fused acting path: argmax over actions, one int32 per row."""
    q = _mlp_q(x_ref, w1_ref, b1_ref, w2_ref, b2_ref, w3_ref, b3_ref,
               bf16_epilogue=bf16_epilogue)
    n_pad = q.shape[-1]
    lane = jax.lax.broadcasted_iota(jnp.int32, q.shape, 1)
    # Mask padded (zero) action lanes to -inf so they can never win the argmax.
    qm = jnp.where(lane < n_actions, q, -jnp.inf)
    m = jnp.max(qm, axis=-1, keepdims=True)
    # First index attaining the max (matches jnp.argmax tie-breaking).
    idx = jnp.where(qm == m, lane.astype(jnp.float32), jnp.float32(n_pad))
    act_ref[...] = jnp.min(idx, axis=-1, keepdims=True).astype(jnp.int32)


def prepare_dqn_params(params):
    """Pad + cast parameters for the Pallas kernels.

    Call ONCE at init (and again after each optimizer step) -- NOT inside the
    per-call forward.  Weights become bf16 with K padded to a multiple of 16 and
    the output dim padded to a multiple of 128; biases stay f32.
    """
    n_obs, hidden = params["w1"].shape
    n_actions = params["w3"].shape[1]
    k_pad = _round_up(n_obs, 16)        # 16: full bf16 sublane packing
    n_pad = _round_up(n_actions, 128)   # lane-dense output store
    bf = jnp.bfloat16
    w1 = jnp.zeros((k_pad, hidden), bf).at[:n_obs, :].set(params["w1"].astype(bf))
    w2 = params["w2"].astype(bf)
    w3 = jnp.zeros((hidden, n_pad), bf).at[:, :n_actions].set(params["w3"].astype(bf))
    b1 = params["b1"].astype(jnp.float32).reshape(1, hidden)
    b2 = params["b2"].astype(jnp.float32).reshape(1, hidden)
    b3 = jnp.zeros((1, n_pad), jnp.float32).at[:, :n_actions].set(
        params["b3"].astype(jnp.float32).reshape(1, n_actions))
    return {"w1": w1, "b1": b1, "w2": w2, "b2": b2, "w3": w3, "b3": b3,
            "n_obs": n_obs, "n_actions": n_actions, "k_pad": k_pad, "n_pad": n_pad}


def _choose_tiling(B, tile_b):
    if B <= tile_b:
        tb = _round_up(max(B, 16), 16)   # single grid step for small/moderate B
        return tb, tb
    steps = _cdiv(B, tile_b)
    if steps % 2 == 1:
        steps += 1                       # even #steps -> both v7x TCs busy
    tb = _round_up(_cdiv(B, steps), 16)
    return tb, steps * tb


def _pallas_mlp_call(x, prepped, kernel, out_width, out_dtype, tile_b):
    B, n_obs = x.shape
    k_pad, hidden = prepped["w1"].shape
    n_pad = prepped["w3"].shape[1]
    tile_b, b_pad = _choose_tiling(B, tile_b)

    # Only the input needs per-call padding/casting (params are pre-prepared).
    x_p = jnp.zeros((b_pad, k_pad), jnp.bfloat16).at[:B, :n_obs].set(
        x.astype(jnp.bfloat16))

    def const(a):
        return pl.BlockSpec(a.shape, lambda i: (0,) * a.ndim)

    flops = 2 * b_pad * (k_pad * hidden + hidden * hidden + hidden * n_pad)
    param_bytes = sum(prepped[k].size * prepped[k].dtype.itemsize
                      for k in ("w1", "b1", "w2", "b2", "w3", "b3"))
    bytes_accessed = (x_p.size * x_p.dtype.itemsize + param_bytes
                      + b_pad * out_width * jnp.dtype(out_dtype).itemsize)

    out = pl.pallas_call(
        kernel,
        out_shape=jax.ShapeDtypeStruct((b_pad, out_width), out_dtype),
        grid=(b_pad // tile_b,),
        in_specs=[
            pl.BlockSpec((tile_b, k_pad), lambda i: (i, 0)),
            const(prepped["w1"]), const(prepped["b1"]),
            const(prepped["w2"]), const(prepped["b2"]),
            const(prepped["w3"]), const(prepped["b3"]),
        ],
        out_specs=pl.BlockSpec((tile_b, out_width), lambda i: (i, 0)),
        compiler_params=pltpu.CompilerParams(dimension_semantics=("parallel",)),
        cost_estimate=pl.CostEstimate(flops=flops, transcendentals=0,
                                      bytes_accessed=bytes_accessed),
    )(x_p, prepped["w1"], prepped["b1"], prepped["w2"], prepped["b2"],
      prepped["w3"], prepped["b3"])
    return out, B


def dqn_forward(x, prepped, *, tile_b=1024, out_dtype=jnp.bfloat16,
                bf16_epilogue=None, unpad=True):
    """Q-values for all actions.  x: (B, n_observations) f32; prepped from
    prepare_dqn_params().  Returns (B, n_actions) in out_dtype."""
    if bf16_epilogue is None:
        bf16_epilogue = _default_bf16_epilogue()
    kernel = functools.partial(_dqn_fwd_kernel, bf16_epilogue=bf16_epilogue)
    n_pad = prepped["w3"].shape[1]
    out, B = _pallas_mlp_call(x, prepped, kernel, n_pad, out_dtype, tile_b)
    if unpad:
        # NOTE: for best large-batch perf, consume the padded output (unpad=False)
        # or use dqn_select_action instead of paying this extra slice pass.
        return out[:B, :prepped["n_actions"]]
    return out


def dqn_select_action(x, prepped, *, tile_b=1024, bf16_epilogue=None):
    """Fused acting path: argmax_a Q(x, a).  Returns int32 actions of shape (B,)."""
    if bf16_epilogue is None:
        bf16_epilogue = _default_bf16_epilogue()
    kernel = functools.partial(_dqn_argmax_kernel,
                               n_actions=prepped["n_actions"],
                               bf16_epilogue=bf16_epilogue)
    out, B = _pallas_mlp_call(x, prepped, kernel, 1, jnp.int32, tile_b)
    return out[:B, 0]
    # TODO(synk): epsilon-greedy sampling could also be fused (pltpu.prng_*).


def init_dqn_params(key, n_observations, n_actions, hidden=HIDDEN):
    """PyTorch nn.Linear-style init U(-1/sqrt(fan_in), 1/sqrt(fan_in));
    weights stored as (in, out)."""
    def linear(k, fan_in, fan_out):
        kw, kb = jax.random.split(k)
        bound = 1.0 / jnp.sqrt(float(fan_in))
        w = jax.random.uniform(kw, (fan_in, fan_out), jnp.float32, -bound, bound)
        b = jax.random.uniform(kb, (1, fan_out), jnp.float32, -bound, bound)
        return w, b

    k1, k2, k3 = jax.random.split(key, 3)
    w1, b1 = linear(k1, n_observations, hidden)
    w2, b2 = linear(k2, hidden, hidden)
    w3, b3 = linear(k3, hidden, n_actions)
    return {"w1": w1, "b1": b1, "w2": w2, "b2": b2, "w3": w3, "b3": b3}


def dqn_reference_f32(x, params):
    h1 = jnp.maximum(x @ params["w1"] + params["b1"], 0.0)
    h2 = jnp.maximum(h1 @ params["w2"] + params["b2"], 0.0)
    return h2 @ params["w3"] + params["b3"]


if __name__ == "__main__":
    n_observations = 4   # e.g. CartPole observation dim
    n_actions = 2
    batch = 8

    key = jax.random.PRNGKey(0)
    kx, kp = jax.random.split(key)
    x = jax.random.normal(kx, (batch, n_observations), jnp.float32)
    params = init_dqn_params(kp, n_observations, n_actions)
    prepped = prepare_dqn_params(params)   # hoisted out of the per-call forward

    # Q-value path (default bf16 output) and f32-output variant.
    q = jax.block_until_ready(dqn_forward(x, prepped))
    assert q.shape == (batch, n_actions)
    q_f32 = jax.block_until_ready(dqn_forward(x, prepped, out_dtype=jnp.float32))

    # Fused argmax acting path.
    acts = jax.block_until_ready(dqn_select_action(x, prepped))
    assert acts.shape == (batch,)

    # Correctness vs. pure-f32 reference (loose tol: bf16 MXU operands).
    ref = dqn_reference_f32(x, params)
    assert jnp.allclose(q.astype(jnp.float32), ref, atol=3e-2, rtol=3e-2), \
        "mismatch vs f32 reference (bf16 output)"
    assert jnp.allclose(q_f32, ref, atol=3e-2, rtol=3e-2), \
        "mismatch vs f32 reference (f32 output)"
    assert jnp.array_equal(acts, jnp.argmax(q_f32, axis=-1).astype(acts.dtype)), \
        "fused argmax mismatch"

    print("KERNEL_OK")
</pallas_src>

<mosaic_0001>
module attributes {stable_mosaic.version = 11 : i64} {
  func.func @_dqn_fwd_kernel(%arg0: i32, %arg1: memref<16x16xbf16, #tpu.memory_space<vmem>>, %arg2: memref<16x128xbf16, #tpu.memory_space<vmem>>, %arg3: memref<1x128xf32, #tpu.memory_space<vmem>>, %arg4: memref<128x128xbf16, #tpu.memory_space<vmem>>, %arg5: memref<1x128xf32, #tpu.memory_space<vmem>>, %arg6: memref<128x128xbf16, #tpu.memory_space<vmem>>, %arg7: memref<1x128xf32, #tpu.memory_space<vmem>>, %arg8: memref<16x128xbf16, #tpu.memory_space<vmem>>) attributes {dimension_semantics = [#tpu.dimension_semantics<parallel>], iteration_bounds = array<i64: 1>, scalar_prefetch = 0 : i64, scratch_operands = 0 : i64, tpu.core_type = #tpu.core_type<tc>, window_params = [{transform_indices = @transform_0, window_bounds = array<i64: 16, 16>}, {pipeline_mode = #tpu.pipeline_mode<synchronous>, transform_indices = @transform_1, window_bounds = array<i64: 16, 128>}, {pipeline_mode = #tpu.pipeline_mode<synchronous>, transform_indices = @transform_2, window_bounds = array<i64: 1, 128>}, {pipeline_mode = #tpu.pipeline_mode<synchronous>, transform_indices = @transform_3, window_bounds = array<i64: 128, 128>}, {pipeline_mode = #tpu.pipeline_mode<synchronous>, transform_indices = @transform_4, window_bounds = array<i64: 1, 128>}, {pipeline_mode = #tpu.pipeline_mode<synchronous>, transform_indices = @transform_5, window_bounds = array<i64: 128, 128>}, {pipeline_mode = #tpu.pipeline_mode<synchronous>, transform_indices = @transform_6, window_bounds = array<i64: 1, 128>}, {transform_indices = @transform_7, window_bounds = array<i64: 16, 128>}]} {
    %c0 = arith.constant 0 : index
    %c0_0 = arith.constant 0 : index
    %0 = vector.load %arg1[%c0, %c0_0] : memref<16x16xbf16, #tpu.memory_space<vmem>>, vector<16x16xbf16>
    %c0_1 = arith.constant 0 : index
    %c0_2 = arith.constant 0 : index
    %1 = vector.load %arg2[%c0_1, %c0_2] : memref<16x128xbf16, #tpu.memory_space<vmem>>, vector<16x128xbf16>
    %cst = arith.constant dense<0.000000e+00> : vector<16x128xf32>
    %2 = tpu.matmul %0, %1, %cst {dimension_numbers = #tpu.dot_dimension_numbers<[1], [0], [0], [1], [0, 0, 1, 1], [], []>} : vector<16x16xbf16>, vector<16x128xbf16>, vector<16x128xf32> -> vector<16x128xf32>
    %3 = arith.truncf %2 : vector<16x128xf32> to vector<16x128xbf16>
    %c0_3 = arith.constant 0 : index
    %c0_4 = arith.constant 0 : index
    %4 = vector.load %arg3[%c0_3, %c0_4] : memref<1x128xf32, #tpu.memory_space<vmem>>, vector<1x128xf32>
    %5 = arith.truncf %4 : vector<1x128xf32> to vector<1x128xbf16>
    %6 = vector.broadcast %5 : vector<1x128xbf16> to vector<16x128xbf16>
    %7 = arith.addf %3, %6 : vector<16x128xbf16>
    %cst_5 = arith.constant 0.000000e+00 : bf16
    %8 = vector.broadcast %cst_5 : bf16 to vector<16x128xbf16>
    %9 = arith.maximumf %7, %8 : vector<16x128xbf16>
    %c0_6 = arith.constant 0 : index
    %c0_7 = arith.constant 0 : index
    %10 = vector.load %arg4[%c0_6, %c0_7] : memref<128x128xbf16, #tpu.memory_space<vmem>>, vector<128x128xbf16>
    %cst_8 = arith.constant dense<0.000000e+00> : vector<16x128xf32>
    %11 = tpu.matmul %9, %10, %cst_8 {dimension_numbers = #tpu.dot_dimension_numbers<[1], [0], [0], [1], [0, 0, 1, 1], [], []>} : vector<16x128xbf16>, vector<128x128xbf16>, vector<16x128xf32> -> vector<16x128xf32>
    %12 = arith.truncf %11 : vector<16x128xf32> to vector<16x128xbf16>
    %c0_9 = arith.constant 0 : index
    %c0_10 = arith.constant 0 : index
    %13 = vector.load %arg5[%c0_9, %c0_10] : memref<1x128xf32, #tpu.memory_space<vmem>>, vector<1x128xf32>
    %14 = arith.truncf %13 : vector<1x128xf32> to vector<1x128xbf16>
    %15 = vector.broadcast %14 : vector<1x128xbf16> to vector<16x128xbf16>
    %16 = arith.addf %12, %15 : vector<16x128xbf16>
    %cst_11 = arith.constant 0.000000e+00 : bf16
    %17 = vector.broadcast %cst_11 : bf16 to vector<16x128xbf16>
    %18 = arith.maximumf %16, %17 : vector<16x128xbf16>
    %c0_12 = arith.constant 0 : index
    %c0_13 = arith.constant 0 : index
    %19 = vector.load %arg6[%c0_12, %c0_13] : memref<128x128xbf16, #tpu.memory_space<vmem>>, vector<128x128xbf16>
    %cst_14 = arith.constant dense<0.000000e+00> : vector<16x128xf32>
    %20 = tpu.matmul %18, %19, %cst_14 {dimension_numbers = #tpu.dot_dimension_numbers<[1], [0], [0], [1], [0, 0, 1, 1], [], []>} : vector<16x128xbf16>, vector<128x128xbf16>, vector<16x128xf32> -> vector<16x128xf32>
    %c0_15 = arith.constant 0 : index
    %c0_16 = arith.constant 0 : index
    %21 = vector.load %arg7[%c0_15, %c0_16] : memref<1x128xf32, #tpu.memory_space<vmem>>, vector<1x128xf32>
    %22 = vector.broadcast %21 : vector<1x128xf32> to vector<16x128xf32>
    %23 = arith.addf %20, %22 : vector<16x128xf32>
    %24 = arith.truncf %23 : vector<16x128xf32> to vector<16x128xbf16>
    %c0_17 = arith.constant 0 : index
    %c0_18 = arith.constant 0 : index
    %25 = vector.load %arg8[%c0_17, %c0_18] : memref<16x128xbf16, #tpu.memory_space<vmem>>, vector<16x128xbf16>
    tpu.vector_store %arg8[%c0_17, %c0_18], %24 {strides = array<i32>} : memref<16x128xbf16, #tpu.memory_space<vmem>>, vector<16x128xbf16>,
    return
  }
  func.func @transform_0(%arg0: i32) -> (i32, i32) {
    %c0_i32 = arith.constant 0 : i32
    %c0_i32_0 = arith.constant 0 : i32
    return %arg0, %c0_i32 : i32, i32
  }
  func.func @transform_1(%arg0: i32) -> (i32, i32) {
    %c0_i32 = arith.constant 0 : i32
    %c0_i32_0 = arith.constant 0 : i32
    %c0_i32_1 = arith.constant 0 : i32
    return %c0_i32, %c0_i32_0 : i32, i32
  }
  func.func @transform_2(%arg0: i32) -> (i32, i32) {
    %c0_i32 = arith.constant 0 : i32
    %c0_i32_0 = arith.constant 0 : i32
    %c0_i32_1 = arith.constant 0 : i32
    return %c0_i32, %c0_i32_0 : i32, i32
  }
  func.func @transform_3(%arg0: i32) -> (i32, i32) {
    %c0_i32 = arith.constant 0 : i32
    %c0_i32_0 = arith.constant 0 : i32
    %c0_i32_1 = arith.constant 0 : i32
    return %c0_i32, %c0_i32_0 : i32, i32
  }
  func.func @transform_4(%arg0: i32) -> (i32, i32) {
    %c0_i32 = arith.constant 0 : i32
    %c0_i32_0 = arith.constant 0 : i32
    %c0_i32_1 = arith.constant 0 : i32
    return %c0_i32, %c0_i32_0 : i32, i32
  }
  func.func @transform_5(%arg0: i32) -> (i32, i32) {
    %c0_i32 = arith.constant 0 : i32
    %c0_i32_0 = arith.constant 0 : i32
    %c0_i32_1 = arith.constant 0 : i32
    return %c0_i32, %c0_i32_0 : i32, i32
  }
  func.func @transform_6(%arg0: i32) -> (i32, i32) {
    %c0_i32 = arith.constant 0 : i32
    %c0_i32_0 = arith.constant 0 : i32
    %c0_i32_1 = arith.constant 0 : i32
    return %c0_i32, %c0_i32_0 : i32, i32
  }
  func.func @transform_7(%arg0: i32) -> (i32, i32) {
    %c0_i32 = arith.constant 0 : i32
    %c0_i32_0 = arith.constant 0 : i32
    return %arg0, %c0_i32 : i32, i32
  }
}

</mosaic_0001>

<llo_original>
// kernel: tpu_custom_call.1
$region0: #{tpu_custom_call.1}
  #allocation0 [shape = 'u32[]', space=smem, size = 0x4, offset = 0x4, fixed_abs, tag = 'smem constant byte address 0x4 - core index']
  #allocation1 [shape = 'u32[144,128]{1,0:T(1,128)}', space=vmem, size = 0x12000, scoped, tag = 'internal scratch']
  %s0 = inlined_call_operand.hbm [shape: bf16[16,16], index: 0, kind: input, shape index: {}]
  %s1 = inlined_call_operand.hbm [shape: bf16[16,128], index: 1, kind: input, shape index: {}]
  %s2 = inlined_call_operand.vmem [shape: f32[1,128], index: 2, kind: input, shape index: {}]
  %s3 = inlined_call_operand.hbm [shape: bf16[128,128], index: 3, kind: input, shape index: {}]
  %s4 = inlined_call_operand.vmem [shape: f32[1,128], index: 4, kind: input, shape index: {}]
  %s5 = inlined_call_operand.hbm [shape: bf16[128,128], index: 5, kind: input, shape index: {}]
  %s6 = inlined_call_operand.vmem [shape: f32[1,128], index: 6, kind: input, shape index: {}]
  %s7 = inlined_call_operand.hbm [shape: bf16[16,128], index: 7, kind: output, shape index: {}]
  %s8 = sld [smem:[#allocation0]]
  $region54: #{tpu_custom_call.1} parent=0
    _
  %s10 = ssub.s32 1, %s8
  %s11 = scalar_select 0, %s10, %s8
  $region1: #{tpu_custom_call.1} parent=0
    #allocation2 [shape = 'u8[4096]{0}', space=vmem, size = 0x1000, scoped, tag = 'input window, operand 0, single buffered']
    #allocation3 [shape = 's32[1]{0}', space=sflag, size = 0x4, scoped, tag = 'scoped memory for tpu_custom_call.1']
    #allocation4 [shape = 's32[1]{0}', space=sflag, size = 0x4, scoped, tag = 'scoped memory for tpu_custom_call.1']
    #allocation5 [shape = 'u8[4096]{0}', space=vmem, size = 0x1000, scoped, tag = 'input window, operand 1, single buffered']
    #allocation6 [shape = 's32[1]{0}', space=sflag, size = 0x4, scoped, tag = 'scoped memory for tpu_custom_call.1']
    #allocation7 [shape = 'u8[32768]{0}', space=vmem, size = 0x8000, scoped, tag = 'input window, operand 3, single buffered']
    #allocation8 [shape = 'u8[32768]{0}', space=vmem, size = 0x8000, scoped, tag = 'input window, operand 5, single buffered']
    #allocation9 [shape = 's32[1]{0}', space=sflag, size = 0x4, scoped, tag = 'scoped memory for tpu_custom_call.1']
    #allocation10 [shape = 'u8[4096]{0}', space=vmem, size = 0x1000, scoped, tag = 'output window, operand 0, single buffered']
    %12 = vsyncpa [#allocation3], 0
    %13 = vsyncpa [#allocation6], 0
    %14 = vsyncpa [#allocation9], 0
    %15 = vsyncpa [#allocation4], 0
    // Predicated region
    $region2: #{tpu_custom_call.1} parent=1 // pred_check
      _
    $region3: #{tpu_custom_call.1} parent=1 // pred_check_branch
      %17 = sbr.rel (0) target = $region5
    $region4: #{tpu_custom_call.1} parent=1 // pred_region
      %s19 = ssub.s32 128, 128
      %20 = vsyncadd [#allocation3], %s19
      %s21 = sshll.u32 [#allocation2], 4
      %s22 = int_to_ptr.vmem [resolvable:$true] %s21
      %27 = dma.hbm_to_vmem [thread:$0]  %s0, 128, %s22, [#allocation3], 64, 64, 4
    $region5: #{tpu_custom_call.1} parent=1 // pred_fallthru
      _
    // Predicated region
    $region6: #{tpu_custom_call.1} parent=1 // pred_check
      _
    $region7: #{tpu_custom_call.1} parent=1 // pred_check_branch
      %29 = sbr.rel (0) target = $region9
    $region8: #{tpu_custom_call.1} parent=1 // pred_region
      %s31 = ssub.s32 128, 128
      %32 = vsyncadd [#allocation6], %s31
      %s33 = sshll.u32 [#allocation5], 4
      %s34 = int_to_ptr.vmem [resolvable:$true] %s33
      %39 = dma.hbm_to_vmem [thread:$0]  %s1, 128, %s34, [#allocation6], 64, 64, 4
    $region9: #{tpu_custom_call.1} parent=1 // pred_fallthru
      _
    // Predicated region
    $region10: #{tpu_custom_call.1} parent=1 // pred_check
      _
    $region11: #{tpu_custom_call.1} parent=1 // pred_check_branch
      %41 = sbr.rel (0) target = $region13
    $region12: #{tpu_custom_call.1} parent=1 // pred_region
      _
    $region13: #{tpu_custom_call.1} parent=1 // pred_fallthru
      _
    // Predicated region
    $region14: #{tpu_custom_call.1} parent=1 // pred_check
      _
    $region15: #{tpu_custom_call.1} parent=1 // pred_check_branch
      %43 = sbr.rel (0) target = $region17
    $region16: #{tpu_custom_call.1} parent=1 // pred_region
      %s45 = ssub.s32 1024, 1024
      %46 = vsyncadd [#allocation6], %s45
      %s47 = sshll.u32 [#allocation7], 4
      %s48 = int_to_ptr.vmem [resolvable:$true] %s47
      %53 = dma.hbm_to_vmem [thread:$0]  %s3, 1024, %s48, [#allocation6], 64, 64, 4
    $region17: #{tpu_custom_call.1} parent=1 // pred_fallthru
      _
    // Predicated region
    $region18: #{tpu_custom_call.1} parent=1 // pred_check
      _
    $region19: #{tpu_custom_call.1} parent=1 // pred_check_branch
      %55 = sbr.rel (0) target = $region21
    $region20: #{tpu_custom_call.1} parent=1 // pred_region
      _
    $region21: #{tpu_custom_call.1} parent=1 // pred_fallthru
      _
    // Predicated region
    $region22: #{tpu_custom_call.1} parent=1 // pred_check
      _
    $region23: #{tpu_custom_call.1} parent=1 // pred_check_branch
      %57 = sbr.rel (0) target = $region25
    $region24: #{tpu_custom_call.1} parent=1 // pred_region
      %s59 = ssub.s32 1024, 1024
      %60 = vsyncadd [#allocation9], %s59
      %s61 = sshll.u32 [#allocation8], 4
      %s62 = int_to_ptr.vmem [resolvable:$true] %s61
      %67 = dma.hbm_to_vmem [thread:$0]  %s5, 1024, %s62, [#allocation9], 64, 64, 4
    $region25: #{tpu_custom_call.1} parent=1 // pred_fallthru
      _
    // Predicated region
    $region26: #{tpu_custom_call.1} parent=1 // pred_check
      _
    $region27: #{tpu_custom_call.1} parent=1 // pred_check_branch
      %69 = sbr.rel (0) target = $region29
    $region28: #{tpu_custom_call.1} parent=1 // pred_region
      _
    $region29: #{tpu_custom_call.1} parent=1 // pred_fallthru
      _
    // Predicated region
    $region30: #{tpu_custom_call.1} parent=1 // pred_check
      _
    $region31: #{tpu_custom_call.1} parent=1 // pred_check_branch
      %71 = sbr.rel (0) target = $region33
    $region32: #{tpu_custom_call.1} parent=1 // pred_region
      %72 = dma.done [#allocation3], 128
    $region33: #{tpu_custom_call.1} parent=1 // pred_fallthru
      _
    // Predicated region
    $region34: #{tpu_custom_call.1} parent=1 // pred_check
      _
    $region35: #{tpu_custom_call.1} parent=1 // pred_check_branch
      %74 = sbr.rel (0) target = $region37
    $region36: #{tpu_custom_call.1} parent=1 // pred_region
      %75 = dma.done [#allocation6], 128
    $region37: #{tpu_custom_call.1} parent=1 // pred_fallthru
      _
    // Predicated region
    $region38: #{tpu_custom_call.1} parent=1 // pred_check
      _
    $region39: #{tpu_custom_call.1} parent=1 // pred_check_branch
      %77 = sbr.rel (0) target = $region41
    $region40: #{tpu_custom_call.1} parent=1 // pred_region
      %78 = dma.done [#allocation6], 1024
    $region41: #{tpu_custom_call.1} parent=1 // pred_fallthru
      _
    // Predicated region
    $region42: #{tpu_custom_call.1} parent=1 // pred_check
      _
    $region43: #{tpu_custom_call.1} parent=1 // pred_check_branch
      %80 = sbr.rel (0) target = $region45
    $region44: #{tpu_custom_call.1} parent=1 // pred_region
      %81 = dma.done [#allocation9], 1024
    $region45: #{tpu_custom_call.1} parent=1 // pred_fallthru
      _
    %v83 = vld [vmem:[#allocation2] sm:$0xf]
    %v84 = vld [vmem:[#allocation2 + $0x4] sm:$0xf]
    %v85 = vld [vmem:[#allocation5] sm:$0xf]
    %v86 = vld [vmem:[#allocation5 + $0x4] sm:$0xf]
    %v89 = vunpack.c.l.b16 %v83
    %v90 = vunpack.c.l.b16 %v84
    %v91 = vpack.c.b16 %v90, %v89
    %v94 = vunpack.c.l.b16 %v85
    %v95 = vunpack.c.l.b16 %v86
    %v96 = vpack.c.b16 %v95, %v94
    %vm98 = vcmask 130048
    %v100 = vsel %vm98, %v91, 0
    %102 = vmatprep.subr.bf16.mxu0 0
    %103 = vmatpush1.bf16.msra.mxu0 0
    %104 = vmatprep.subr.bf16.mxu0 0
    %105 = vmatpush1.bf16.msra.mxu0 0
    %106 = vmatprep.subr.bf16.mxu0 0
    %107 = vmatpush1.bf16.msra.mxu0 0
    %108 = vmatprep.subr.bf16.mxu0 0
    %109 = vmatpush1.bf16.msra.mxu0 0
    %110 = vmatprep.subr.bf16.mxu0 0
    %111 = vmatpush1.bf16.msra.mxu0 0
    %112 = vmatprep.subr.bf16.mxu0 0
    %113 = vmatpush1.bf16.msra.mxu0 0
    %114 = vmatprep.subr.bf16.mxu0 0
    %115 = vmatpush1.bf16.msra.mxu0 0
    %116 = vmatprep.subr.bf16.mxu0 0
    %117 = vmatpush1.bf16.msra.mxu0 %v96
    %118 = vmatprep.subr.bf16.mxu0 0
    %119 = vmatpush2.bf16.msra.mxu0 0
    %120 = vmatprep.subr.bf16.mxu0 0
    %121 = vmatpush2.bf16.msra.mxu0 0
    %122 = vmatprep.subr.bf16.mxu0 0
    %123 = vmatpush2.bf16.msra.mxu0 0
    %124 = vmatprep.subr.bf16.mxu0 0
    %125 = vmatpush2.bf16.msra.mxu0 0
    %126 = vmatprep.subr.bf16.mxu0 0
    %127 = vmatpush2.bf16.msra.mxu0 0
    %128 = vmatprep.subr.bf16.mxu0 0
    %129 = vmatpush2.bf16.msra.mxu0 0
    %130 = vmatprep.subr.bf16.mxu0 0
    %131 = vmatpush2.bf16.msra.mxu0 0
    %132 = vmatprep.subr.bf16.mxu0 0
    %133 = vmatpush2.bf16.msra.mxu0 0
    %134 = vmatprep.mubr.bf16.mxu0 0
    %135 = vmatmul.mubr.bf16.gmra.mxu0 %v100
    %v136 = vpop.f32.mrf.mxu0
    %v137 = vadd.f32 0.0, %v136
    %v138 = vpop.f32.mrf.mxu0
    %v139 = vpop.f32.mrf.mxu0
    %v140 = vadd.f32 0.0, %v139
    %v141 = vpop.f32.mrf.mxu0
    %142 = vdwg.mxu0
    %v143 = vpack.c.bf16 %v140, %v137
    %v144 = vld [vmem:[%s2] sm:$0x1]
    %v145 = vpack.c.bf16 %v144, %v144
    %v147 = vpack.i.b16 %v145, %v145
    %v149 = vlaneseq
    %v150 = vshrl.u32 %v149, 7
    %v151 = vsub.s32 0, %v150
    %v152 = vrot.slane %v147, %v151
    %v153 = vadd.bf16 %v143, %v152
    %v154 = vmax.bf16 %v153, 0
    %v155 = vld [vmem:[#allocation7] sm:$0xf]
    %v156 = vld [vmem:[#allocation7 + $0x4] sm:$0xf]
    %v157 = vld [vmem:[#allocation7 + $0x8] sm:$0xf]
    %v158 = vld [vmem:[#allocation7 + $0xc] sm:$0xf]
    %v159 = vld [vmem:[#allocation7 + $0x10] sm:$0xf]
    %v160 = vld [vmem:[#allocation7 + $0x14] sm:$0xf]
    %v161 = vld [vmem:[#allocation7 + $0x18] sm:$0xf]
    %v162 = vld [vmem:[#allocation7 + $0x1c] sm:$0xf]
    %v163 = vld [vmem:[#allocation7 + $0x20] sm:$0xf]
    %v164 = vld [vmem:[#allocation7 + $0x24] sm:$0xf]
    %v165 = vld [vmem:[#allocation7 + $0x28] sm:$0xf]
    %v166 = vld [vmem:[#allocation7 + $0x2c] sm:$0xf]
    %v167 = vld [vmem:[#allocation7 + $0x30] sm:$0xf]
    %v168 = vld [vmem:[#allocation7 + $0x34] sm:$0xf]
    %v169 = vld [vmem:[#allocation7 + $0x38] sm:$0xf]
    %v170 = vld [vmem:[#allocation7 + $0x3c] sm:$0xf]
    %v187 = vunpack.c.l.b16 %v155
    %v188 = vunpack.c.l.b16 %v156
    %v189 = vunpack.c.l.b16 %v157
    %v190 = vunpack.c.l.b16 %v158
    %v191 = vunpack.c.l.b16 %v159
    %v192 = vunpack.c.l.b16 %v160
    %v193 = vunpack.c.l.b16 %v161
    %v194 = vunpack.c.l.b16 %v162
    %v195 = vunpack.c.l.b16 %v163
    %v196 = vunpack.c.l.b16 %v164
    %v197 = vunpack.c.l.b16 %v165
    %v198 = vunpack.c.l.b16 %v166
    %v199 = vunpack.c.l.b16 %v167
    %v200 = vunpack.c.l.b16 %v168
    %v201 = vunpack.c.l.b16 %v169
    %v202 = vunpack.c.l.b16 %v170
    %v203 = vpack.c.b16 %v188, %v187
    %v204 = vpack.c.b16 %v190, %v189
    %v205 = vpack.c.b16 %v192, %v191
    %v206 = vpack.c.b16 %v194, %v193
    %v207 = vpack.c.b16 %v196, %v195
    %v208 = vpack.c.b16 %v198, %v197
    %v209 = vpack.c.b16 %v200, %v199
    %v210 = vpack.c.b16 %v202, %v201
    %219 = vmatprep.subr.bf16.mxu0 0
    %220 = vmatpush1.bf16.msra.mxu0 %v210
    %221 = vmatprep.subr.bf16.mxu0 0
    %222 = vmatpush1.bf16.msra.mxu0 %v209
    %223 = vmatprep.subr.bf16.mxu0 0
    %224 = vmatpush1.bf16.msra.mxu0 %v208
    %225 = vmatprep.subr.bf16.mxu0 0
    %226 = vmatpush1.bf16.msra.mxu0 %v207
    %227 = vmatprep.subr.bf16.mxu0 0
    %228 = vmatpush1.bf16.msra.mxu0 %v206
    %229 = vmatprep.subr.bf16.mxu0 0
    %230 = vmatpush1.bf16.msra.mxu0 %v205
    %231 = vmatprep.subr.bf16.mxu0 0
    %232 = vmatpush1.bf16.msra.mxu0 %v204
    %233 = vmatprep.subr.bf16.mxu0 0
    %234 = vmatpush1.bf16.msra.mxu0 %v203
    %235 = vmatprep.subr.bf16.mxu0 0
    %236 = vmatpush2.bf16.msra.mxu0 0
    %237 = vmatprep.subr.bf16.mxu0 0
    %238 = vmatpush2.bf16.msra.mxu0 0
    %239 = vmatprep.subr.bf16.mxu0 0
    %240 = vmatpush2.bf16.msra.mxu0 0
    %241 = vmatprep.subr.bf16.mxu0 0
    %242 = vmatpush2.bf16.msra.mxu0 0
    %243 = vmatprep.subr.bf16.mxu0 0
    %244 = vmatpush2.bf16.msra.mxu0 0
    %245 = vmatprep.subr.bf16.mxu0 0
    %246 = vmatpush2.bf16.msra.mxu0 0
    %247 = vmatprep.subr.bf16.mxu0 0
    %248 = vmatpush2.bf16.msra.mxu0 0
    %249 = vmatprep.subr.bf16.mxu0 0
    %250 = vmatpush2.bf16.msra.mxu0 0
    %251 = vmatprep.mubr.bf16.mxu0 0
    %252 = vmatmul.mubr.bf16.gmra.mxu0 %v154
    %v253 = vpop.f32.mrf.mxu0
    %v254 = vadd.f32 0.0, %v253
    %v255 = vpop.f32.mrf.mxu0
    %v256 = vpop.f32.mrf.mxu0
    %v257 = vadd.f32 0.0, %v256
    %v258 = vpop.f32.mrf.mxu0
    %259 = vdwg.mxu0
    %v260 = vpack.c.bf16 %v257, %v254
    %v261 = vld [vmem:[%s4] sm:$0x1]
    %v262 = vpack.c.bf16 %v261, %v261
    %v264 = vpack.i.b16 %v262, %v262
    %v266 = vlaneseq
    %v267 = vshrl.u32 %v266, 7
    %v268 = vsub.s32 0, %v267
    %v269 = vrot.slane %v264, %v268
    %v270 = vadd.bf16 %v260, %v269
    %v271 = vmax.bf16 %v270, 0
    %v272 = vld [vmem:[#allocation8] sm:$0xf]
    %v273 = vld [vmem:[#allocation8 + $0x4] sm:$0xf]
    %v274 = vld [vmem:[#allocation8 + $0x8] sm:$0xf]
    %v275 = vld [vmem:[#allocation8 + $0xc] sm:$0xf]
    %v276 = vld [vmem:[#allocation8 + $0x10] sm:$0xf]
    %v277 = vld [vmem:[#allocation8 + $0x14] sm:$0xf]
    %v278 = vld [vmem:[#allocation8 + $0x18] sm:$0xf]
    %v279 = vld [vmem:[#allocation8 + $0x1c] sm:$0xf]
    %v280 = vld [vmem:[#allocation8 + $0x20] sm:$0xf]
    %v281 = vld [vmem:[#allocation8 + $0x24] sm:$0xf]
    %v282 = vld [vmem:[#allocation8 + $0x28] sm:$0xf]
    %v283 = vld [vmem:[#allocation8 + $0x2c] sm:$0xf]
    %v284 = vld [vmem:[#allocation8 + $0x30] sm:$0xf]
    %v285 = vld [vmem:[#allocation8 + $0x34] sm:$0xf]
    %v286 = vld [vmem:[#allocation8 + $0x38] sm:$0xf]
    %v287 = vld [vmem:[#allocation8 + $0x3c] sm:$0xf]
    %v288 = vld [vmem:[%s6] sm:$0x1]
    %v290 = vlaneseq
    %v291 = vshrl.u32 %v290, 7
    %v292 = vsub.s32 0, %v291
    %v293 = vrot.slane %v288, %v292
    %v311 = vunpack.c.l.b16 %v272
    %v312 = vunpack.c.l.b16 %v273
    %v313 = vunpack.c.l.b16 %v274
    %v314 = vunpack.c.l.b16 %v275
    %v315 = vunpack.c.l.b16 %v276
    %v316 = vunpack.c.l.b16 %v277
    %v317 = vunpack.c.l.b16 %v278
    %v318 = vunpack.c.l.b16 %v279
    %v319 = vunpack.c.l.b16 %v280
    %v320 = vunpack.c.l.b16 %v281
    %v321 = vunpack.c.l.b16 %v282
    %v322 = vunpack.c.l.b16 %v283
    %v323 = vunpack.c.l.b16 %v284
    %v324 = vunpack.c.l.b16 %v285
    %v325 = vunpack.c.l.b16 %v286
    %v326 = vunpack.c.l.b16 %v287
    %v327 = vpack.c.b16 %v312, %v311
    %v328 = vpack.c.b16 %v314, %v313
    %v329 = vpack.c.b16 %v316, %v315
    %v330 = vpack.c.b16 %v318, %v317
    %v331 = vpack.c.b16 %v320, %v319
    %v332 = vpack.c.b16 %v322, %v321
    %v333 = vpack.c.b16 %v324, %v323
    %v334 = vpack.c.b16 %v326, %v325
    %343 = vmatprep.subr.bf16.mxu0 0
    %344 = vmatpush1.bf16.msra.mxu0 %v334
    %345 = vmatprep.subr.bf16.mxu0 0
    %346 = vmatpush1.bf16.msra.mxu0 %v333
    %347 = vmatprep.subr.bf16.mxu0 0
    %348 = vmatpush1.bf16.msra.mxu0 %v332
    %349 = vmatprep.subr.bf16.mxu0 0
    %350 = vmatpush1.bf16.msra.mxu0 %v331
    %351 = vmatprep.subr.bf16.mxu0 0
    %352 = vmatpush1.bf16.msra.mxu0 %v330
    %353 = vmatprep.subr.bf16.mxu0 0
    %354 = vmatpush1.bf16.msra.mxu0 %v329
    %355 = vmatprep.subr.bf16.mxu0 0
    %356 = vmatpush1.bf16.msra.mxu0 %v328
    %357 = vmatprep.subr.bf16.mxu0 0
    %358 = vmatpush1.bf16.msra.mxu0 %v327
    %359 = vmatprep.subr.bf16.mxu0 0
    %360 = vmatpush2.bf16.msra.mxu0 0
    %361 = vmatprep.subr.bf16.mxu0 0
    %362 = vmatpush2.bf16.msra.mxu0 0
    %363 = vmatprep.subr.bf16.mxu0 0
    %364 = vmatpush2.bf16.msra.mxu0 0
    %365 = vmatprep.subr.bf16.mxu0 0
    %366 = vmatpush2.bf16.msra.mxu0 0
    %367 = vmatprep.subr.bf16.mxu0 0
    %368 = vmatpush2.bf16.msra.mxu0 0
    %369 = vmatprep.subr.bf16.mxu0 0
    %370 = vmatpush2.bf16.msra.mxu0 0
    %371 = vmatprep.subr.bf16.mxu0 0
    %372 = vmatpush2.bf16.msra.mxu0 0
    %373 = vmatprep.subr.bf16.mxu0 0
    %374 = vmatpush2.bf16.msra.mxu0 0
    %375 = vmatprep.mubr.bf16.mxu0 0
    %376 = vmatmul.mubr.bf16.gmra.mxu0 %v271
    %v377 = vpop.f32.mrf.mxu0
    %v378 = vadd.f32 %v293, %v377
    %v379 = vpop.f32.mrf.mxu0
    %v380 = vpop.f32.mrf.mxu0
    %v381 = vadd.f32 %v293, %v380
    %v382 = vpop.f32.mrf.mxu0
    %383 = vdwg.mxu0
    %v384 = vpack.c.bf16 %v381, %v378
    %v386 = vunpack.c.l.b16 %v384
    %v387 = vunpack.c.h.b16 %v384
    %v388 = vpack.c.b16 %v386, %v386
    %v389 = vpack.c.b16 %v387, %v387
    %392 = vst [vmem:[#allocation10] sm:$0xf] %v388
    %393 = vst [vmem:[#allocation10 + $0x4] sm:$0xf] %v389
    // Predicated region
    $region46: #{tpu_custom_call.1} parent=1 // pred_check
      _
    $region47: #{tpu_custom_call.1} parent=1 // pred_check_branch
      %395 = sbr.rel (0) target = $region49
    $region48: #{tpu_custom_call.1} parent=1 // pred_region
      %s397 = ssub.s32 128, 128
      %398 = vsyncadd [#allocation4], %s397
      %s399 = sshll.u32 [#allocation10], 4
      %s400 = int_to_ptr.vmem [resolvable:$true] %s399
      %405 = dma.vmem_to_hbm [thread:$0]  %s400, 128, %s7, [#allocation4], 64, 64, 4
    $region49: #{tpu_custom_call.1} parent=1 // pred_fallthru
      _
    // Predicated region
    $region50: #{tpu_custom_call.1} parent=1 // pred_check
      _
    $region51: #{tpu_custom_call.1} parent=1 // pred_check_branch
      %407 = sbr.rel (0) target = $region53
    $region52: #{tpu_custom_call.1} parent=1 // pred_region
      %408 = dma.done [#allocation4], 128
    $region53: #{tpu_custom_call.1} parent=1 // pred_fallthru
      _
    %409 = vsyncpa [#allocation3], 1
    %410 = vsyncpa [#allocation6], 1
    %411 = vsyncpa [#allocation9], 1
    %412 = vsyncpa [#allocation4], 1

</llo_original>
